<compile_context>
chip_gen: v6e
topology: v6e:2x2x1
jax: 0.10.0
libtpu: 0.0.40
codegen_flags: <defaults>
</compile_context>

<pallas_src>
import functools

import jax
import jax.numpy as jnp
from jax import lax
from jax.experimental import pallas as pl
from jax.experimental.pallas import tpu as pltpu


_LANE = 128
_SUBLANE = 8
_MAX_TILE_ROWS = 4096  # perf review: 2048-4096 rows at D=128 is the sweet spot


def _vmem_capacity_bytes() -> int:
    """Physical VMEM of the local chip; conservative fallback if unknown."""
    try:
        info = pltpu.get_tpu_info()
        cap = getattr(info, "vmem_capacity_bytes", None)
        if isinstance(cap, int) and cap > 0:
            return cap
    except Exception:
        pass
    return 64 * 1024 * 1024  # v7x value; safe lower bound for 128 MiB chips too


def _num_tensorcores() -> int:
    """TensorCores per chip: 2 on v7x / v4 / v5p megacore parts, else 1."""
    try:
        kind = jax.devices()[0].device_kind.lower()
    except Exception:
        return 1
    if "v7" in kind:
        return 2
    if "v5p" in kind:
        return 2
    if "v4" in kind and "lite" not in kind:
        return 2
    return 1


def _pick_tile_rows(batch: int, dim: int, vmem_cap: int) -> int:
    """Largest batch tile whose double-buffered input set fits half of VMEM."""
    budget = vmem_cap // 2                      # 3 inputs x 2 pipeline buffers
    cap = budget // (3 * 2 * 4 * dim)           # f32 rows that fit the budget
    cap = max(_SUBLANE, (cap // _SUBLANE) * _SUBLANE)
    tb = min(_MAX_TILE_ROWS, cap)
    if batch <= tb:
        return batch                            # single tile == full array dims
    return tb                                   # multiple of 8 -> valid block


def _vmem_limit_bytes(tile_rows: int, dim: int, vmem_cap: int,
                      num_buffers: int = 2) -> int:
    """Honest scoped-VMEM limit: working set + 25% slack, <= 3/4 of physical."""
    inputs = 3 * num_buffers * tile_rows * dim * 4
    acc = max(tile_rows, _SUBLANE) * _LANE * 4      # (TB,1) f32, lane-padded
    out = 2 * _SUBLANE * _LANE * 4                  # double-buffered (8,128)
    limit = int((inputs + acc + out) * 1.25) + (2 << 20)
    return max(4 << 20, min(limit, (vmem_cap * 3) // 4))


def _triplet_loss_kernel(a_ref, p_ref, n_ref, o_ref, acc_ref, *,
                         margin, batch, tile_rows, tiles_per_core,
                         total_tiles, inv_batch, core_split, needs_mask):
    if core_split:
        c = pl.program_id(0)              # core-split axis ("parallel")
        i = pl.program_id(1)              # batch-tile reduction axis
        n_i = pl.num_programs(1)
        tile_id = c * tiles_per_core + i  # unclamped logical tile id
    else:
        i = pl.program_id(0)
        n_i = pl.num_programs(0)
        tile_id = i

    @pl.when(i == 0)
    def _init():
        acc_ref[...] = jnp.zeros_like(acc_ref)

    a = a_ref[...].astype(jnp.float32)
    p = p_ref[...].astype(jnp.float32)
    n = n_ref[...].astype(jnp.float32)

    # pos_dist - neg_dist == sum((p - n) * (p + n - 2a), axis=1):
    # one fused cross-lane reduction instead of two distance reductions.
    d = p - n
    s = p + n - 2.0 * a
    loss = jnp.maximum(jnp.sum(d * s, axis=1, keepdims=True) + margin, 0.0)  # (TB,1)

    if needs_mask:
        # Only the last real tile (possibly partial) and phantom tiles past
        # total_tiles need masking; interior tiles skip the lane-sparse work.
        @pl.when(tile_id < total_tiles - 1)
        def _accumulate_full():
            acc_ref[...] += loss

        @pl.when(tile_id >= total_tiles - 1)
        def _accumulate_masked():
            row = (lax.broadcasted_iota(jnp.int32, loss.shape, 0)
                   + tile_id * tile_rows)
            acc_ref[...] += jnp.where(row < batch, loss, 0.0)
    else:
        acc_ref[...] += loss

    @pl.when(i == n_i - 1)
    def _finalize():
        # Single cross-sublane reduce + 1/B scale, one lane-dense store per core.
        tot = jnp.sum(acc_ref[...], axis=0, keepdims=True)        # (1, 1)
        o_ref[...] = jnp.broadcast_to(tot * inv_batch, o_ref.shape)


def triplet_loss(anchor, positive, negative, margin: float = 0.2, *,
                 tile_rows: int | None = None):
    """Pallas TPU implementation of FaceNet TripletLoss.forward."""
    assert anchor.shape == positive.shape == negative.shape
    assert anchor.ndim == 2
    B, D = anchor.shape

    vmem_cap = _vmem_capacity_bytes()
    TB = tile_rows if tile_rows is not None else _pick_tile_rows(B, D, vmem_cap)
    TB = min(TB, B)
    total_tiles = pl.cdiv(B, TB)

    num_tc = _num_tensorcores()
    core_split = (num_tc >= 2 and total_tiles >= 2)
    NC = 2 if core_split else 1
    tiles_per_core = pl.cdiv(total_tiles, NC)

    # Mask only needed for a partial last tile or a phantom tile (odd split).
    needs_mask = (B % TB != 0) or (core_split and NC * tiles_per_core != total_tiles)

    kernel = functools.partial(
        _triplet_loss_kernel,
        margin=float(margin),
        batch=B,
        tile_rows=TB,
        tiles_per_core=tiles_per_core,
        total_tiles=total_tiles,
        inv_batch=1.0 / B,
        core_split=core_split,
        needs_mask=needs_mask,
    )

    last_block = total_tiles - 1
    if core_split:
        grid = (NC, tiles_per_core)

        def in_map(c, i):
            # Clamp phantom tiles onto the last valid block (their rows are
            # zeroed by the in-kernel mask), so no OOB DMA is ever issued.
            return (jnp.minimum(c * tiles_per_core + i, last_block), 0)

        in_spec = pl.BlockSpec((TB, D), in_map)
        out_spec = pl.BlockSpec((_SUBLANE, _LANE), lambda c, i: (c, 0))
        dim_sem = ("parallel", "arbitrary")
    else:
        grid = (total_tiles,)
        in_spec = pl.BlockSpec((TB, D), lambda i: (i, 0))
        out_spec = pl.BlockSpec((_SUBLANE, _LANE), lambda i: (0, 0))
        dim_sem = ("arbitrary",)

    partials = pl.pallas_call(
        kernel,
        out_shape=jax.ShapeDtypeStruct((_SUBLANE * NC, _LANE), jnp.float32),
        grid_spec=pltpu.PrefetchScalarGridSpec(
            num_scalar_prefetch=0,
            grid=grid,
            in_specs=[in_spec, in_spec, in_spec],
            out_specs=out_spec,
            scratch_shapes=[pltpu.VMEM((TB, 1), jnp.float32)],
        ),
        compiler_params=pltpu.CompilerParams(
            dimension_semantics=dim_sem,
            vmem_limit_bytes=_vmem_limit_bytes(TB, D, vmem_cap),
        ),
    )(anchor, positive, negative)

    # Core c wrote its (already 1/B-scaled) partial at row 8*c, col 0.
    return jnp.sum(partials[::_SUBLANE, 0])


def triplet_loss_ref(anchor, positive, negative, margin: float = 0.2):
    """Pure-JAX reference matching the PyTorch module semantics."""
    pos_dist = jnp.sum((anchor - positive) ** 2, axis=1)
    neg_dist = jnp.sum((anchor - negative) ** 2, axis=1)
    loss = jnp.maximum(pos_dist - neg_dist + margin, 0.0)
    return jnp.mean(loss)


if __name__ == "__main__":
    key = jax.random.PRNGKey(0)

    def _run_case(B, D, margin=0.2, tile_rows=None):
        ka, kp, kn = jax.random.split(jax.random.fold_in(key, B * 131 + D), 3)
        anchor = jax.random.normal(ka, (B, D), dtype=jnp.float32)
        positive = jax.random.normal(kp, (B, D), dtype=jnp.float32)
        negative = jax.random.normal(kn, (B, D), dtype=jnp.float32)

        out = jax.block_until_ready(
            triplet_loss(anchor, positive, negative, margin, tile_rows=tile_rows))
        ref = triplet_loss_ref(anchor, positive, negative, margin)
        assert jnp.allclose(out, ref, rtol=1e-4, atol=1e-4), (B, D, out, ref)

    # Small case consistent with the module (batch=8 embeddings of dim=128).
    _run_case(8, 128)
    # Forced small tiles: 3 tiles, partial last tile, phantom tile on 2-TC chips.
    _run_case(40, 128, tile_rows=16)
    # Default tiling, single moderate tile.
    _run_case(1040, 128)
    # Default tiling with multiple full-size tiles + partial last tile.
    _run_case(8200, 128)

    print("KERNEL_OK")
</pallas_src>

<mosaic_0001>
module attributes {stable_mosaic.version = 11 : i64} {
  func.func @_triplet_loss_kernel(%arg0: i32, %arg1: memref<8x128xf32, #tpu.memory_space<vmem>>, %arg2: memref<8x128xf32, #tpu.memory_space<vmem>>, %arg3: memref<8x128xf32, #tpu.memory_space<vmem>>, %arg4: memref<8x128xf32, #tpu.memory_space<vmem>>, %arg5: memref<8x1xf32, #tpu.memory_space<vmem>>) attributes {dimension_semantics = [#tpu.dimension_semantics<arbitrary>], iteration_bounds = array<i64: 1>, scalar_prefetch = 0 : i64, scratch_operands = 1 : i64, tpu.core_type = #tpu.core_type<tc>, window_params = [{transform_indices = @transform_0, window_bounds = array<i64: 8, 128>}, {transform_indices = @transform_1, window_bounds = array<i64: 8, 128>}, {transform_indices = @transform_2, window_bounds = array<i64: 8, 128>}, {pipeline_mode = #tpu.pipeline_mode<synchronous>, transform_indices = @transform_3, window_bounds = array<i64: 8, 128>}]} {
    %c0_i32 = arith.constant 0 : i32
    %0 = arith.cmpi eq, %arg0, %c0_i32 : i32
    %1 = arith.extui %0 : i1 to i32
    %c0_i32_0 = arith.constant 0 : i32
    %2 = arith.cmpi ne, %1, %c0_i32_0 : i32
    scf.if %2 {
      %cst_15 = arith.constant 0.000000e+00 : f32
      %24 = vector.broadcast %cst_15 : f32 to vector<8x1xf32>
      %c0_16 = arith.constant 0 : index
      %c0_17 = arith.constant 0 : index
      %25 = vector.load %arg5[%c0_16, %c0_17] : memref<8x1xf32, #tpu.memory_space<vmem>>, vector<8x1xf32>
      tpu.vector_store %arg5[%c0_16, %c0_17], %24 {strides = array<i32>} : memref<8x1xf32, #tpu.memory_space<vmem>>, vector<8x1xf32>,
    } else {
    }
    %c0 = arith.constant 0 : index
    %c0_1 = arith.constant 0 : index
    %3 = vector.load %arg1[%c0, %c0_1] : memref<8x128xf32, #tpu.memory_space<vmem>>, vector<8x128xf32>
    %c0_2 = arith.constant 0 : index
    %c0_3 = arith.constant 0 : index
    %4 = vector.load %arg2[%c0_2, %c0_3] : memref<8x128xf32, #tpu.memory_space<vmem>>, vector<8x128xf32>
    %c0_4 = arith.constant 0 : index
    %c0_5 = arith.constant 0 : index
    %5 = vector.load %arg3[%c0_4, %c0_5] : memref<8x128xf32, #tpu.memory_space<vmem>>, vector<8x128xf32>
    %6 = arith.subf %4, %5 : vector<8x128xf32>
    %7 = arith.addf %4, %5 : vector<8x128xf32>
    %cst = arith.constant 2.000000e+00 : f32
    %8 = vector.broadcast %cst : f32 to vector<8x128xf32>
    %9 = arith.mulf %8, %3 : vector<8x128xf32>
    %10 = arith.subf %7, %9 : vector<8x128xf32>
    %11 = arith.mulf %6, %10 : vector<8x128xf32>
    %cst_6 = arith.constant dense<0.000000e+00> : vector<8xf32>
    %12 = vector.multi_reduction <add>, %11, %cst_6 [1] : vector<8x128xf32> to vector<8xf32>
    %13 = vector.shape_cast %12 : vector<8xf32> to vector<8x1xf32>
    %cst_7 = arith.constant 2.000000e-01 : f32
    %14 = vector.broadcast %cst_7 : f32 to vector<8x1xf32>
    %15 = arith.addf %13, %14 : vector<8x1xf32>
    %cst_8 = arith.constant 0.000000e+00 : f32
    %16 = vector.broadcast %cst_8 : f32 to vector<8x1xf32>
    %17 = arith.maximumf %15, %16 : vector<8x1xf32>
    %c0_9 = arith.constant 0 : index
    %c0_10 = arith.constant 0 : index
    %18 = vector.load %arg5[%c0_9, %c0_10] : memref<8x1xf32, #tpu.memory_space<vmem>>, vector<8x1xf32>
    %19 = arith.addf %18, %17 : vector<8x1xf32>
    %c0_11 = arith.constant 0 : index
    %c0_12 = arith.constant 0 : index
    %20 = vector.load %arg5[%c0_11, %c0_12] : memref<8x1xf32, #tpu.memory_space<vmem>>, vector<8x1xf32>
    tpu.vector_store %arg5[%c0_11, %c0_12], %19 {strides = array<i32>} : memref<8x1xf32, #tpu.memory_space<vmem>>, vector<8x1xf32>,
    %c0_i32_13 = arith.constant 0 : i32
    %21 = arith.cmpi eq, %arg0, %c0_i32_13 : i32
    %22 = arith.extui %21 : i1 to i32
    %c0_i32_14 = arith.constant 0 : i32
    %23 = arith.cmpi ne, %22, %c0_i32_14 : i32
    scf.if %23 {
      %c0_15 = arith.constant 0 : index
      %c0_16 = arith.constant 0 : index
      %24 = vector.load %arg5[%c0_15, %c0_16] : memref<8x1xf32, #tpu.memory_space<vmem>>, vector<8x1xf32>
      %cst_17 = arith.constant dense<0.000000e+00> : vector<1xf32>
      %25 = vector.multi_reduction <add>, %24, %cst_17 [0] : vector<8x1xf32> to vector<1xf32>
      %26 = vector.shape_cast %25 : vector<1xf32> to vector<1x1xf32>
      %cst_18 = arith.constant 1.250000e-01 : f32
      %27 = vector.broadcast %cst_18 : f32 to vector<1x1xf32>
      %28 = arith.mulf %26, %27 : vector<1x1xf32>
      %29 = vector.shape_cast %28 : vector<1x1xf32> to vector<1x1xf32>
      %30 = vector.broadcast %29 : vector<1x1xf32> to vector<8x128xf32>
      %c0_19 = arith.constant 0 : index
      %c0_20 = arith.constant 0 : index
      %31 = vector.load %arg4[%c0_19, %c0_20] : memref<8x128xf32, #tpu.memory_space<vmem>>, vector<8x128xf32>
      tpu.vector_store %arg4[%c0_19, %c0_20], %30 {strides = array<i32>} : memref<8x128xf32, #tpu.memory_space<vmem>>, vector<8x128xf32>,
    } else {
    }
    return
  }
  func.func @transform_0(%arg0: i32) -> (i32, i32) {
    %c0_i32 = arith.constant 0 : i32
    %c0_i32_0 = arith.constant 0 : i32
    return %arg0, %c0_i32 : i32, i32
  }
  func.func @transform_1(%arg0: i32) -> (i32, i32) {
    %c0_i32 = arith.constant 0 : i32
    %c0_i32_0 = arith.constant 0 : i32
    return %arg0, %c0_i32 : i32, i32
  }
  func.func @transform_2(%arg0: i32) -> (i32, i32) {
    %c0_i32 = arith.constant 0 : i32
    %c0_i32_0 = arith.constant 0 : i32
    return %arg0, %c0_i32 : i32, i32
  }
  func.func @transform_3(%arg0: i32) -> (i32, i32) {
    %c0_i32 = arith.constant 0 : i32
    %c0_i32_0 = arith.constant 0 : i32
    %c0_i32_1 = arith.constant 0 : i32
    return %c0_i32, %c0_i32_0 : i32, i32
  }
}

</mosaic_0001>

<llo_original>
// kernel: tpu_custom_call.1
$region0: #{tpu_custom_call.1}
  #allocation0 [shape = 'u32[]', space=smem, size = 0x4, offset = 0x4, fixed_abs, tag = 'smem constant byte address 0x4 - core index']
  #allocation1 [shape = 'u32[144,128]{1,0:T(1,128)}', space=vmem, size = 0x12000, scoped, tag = 'internal scratch']
  #allocation2 [shape = 'f32[8,1]{1,0:T(8,128)}', space=vmem, size = 0x1000, scoped, tag = 'scratch operand']
  %s0 = inlined_call_operand.hbm [shape: f32[8,128], index: 0, kind: input, shape index: {}]
  %s1 = inlined_call_operand.hbm [shape: f32[8,128], index: 1, kind: input, shape index: {}]
  %s2 = inlined_call_operand.hbm [shape: f32[8,128], index: 2, kind: input, shape index: {}]
  %s3 = inlined_call_operand.hbm [shape: f32[8,128], index: 3, kind: output, shape index: {}]
  %s4 = sld [smem:[#allocation0]]
  $region42: #{tpu_custom_call.1} parent=0
    _
  %s6 = ssub.s32 1, %s4
  %s7 = scalar_select 0, %s6, %s4
  $region1: #{tpu_custom_call.1} parent=0
    #allocation3 [shape = 'u8[4096]{0}', space=vmem, size = 0x1000, scoped, tag = 'input window, operand 0, single buffered']
    #allocation4 [shape = 's32[1]{0}', space=sflag, size = 0x4, scoped, tag = 'scoped memory for tpu_custom_call.1']
    #allocation5 [shape = 's32[1]{0}', space=sflag, size = 0x4, scoped, tag = 'scoped memory for tpu_custom_call.1']
    #allocation6 [shape = 'u8[4096]{0}', space=vmem, size = 0x1000, scoped, tag = 'input window, operand 1, single buffered']
    #allocation7 [shape = 's32[1]{0}', space=sflag, size = 0x4, scoped, tag = 'scoped memory for tpu_custom_call.1']
    #allocation8 [shape = 'u8[4096]{0}', space=vmem, size = 0x1000, scoped, tag = 'input window, operand 2, single buffered']
    #allocation9 [shape = 'u8[4096]{0}', space=vmem, size = 0x1000, scoped, tag = 'output window, operand 0, single buffered']
    %8 = vsyncpa [#allocation4], 0
    %9 = vsyncpa [#allocation7], 0
    %10 = vsyncpa [#allocation5], 0
    // Predicated region
    $region2: #{tpu_custom_call.1} parent=1 // pred_check
      _
    $region3: #{tpu_custom_call.1} parent=1 // pred_check_branch
      %12 = sbr.rel (0) target = $region5
    $region4: #{tpu_custom_call.1} parent=1 // pred_region
      %s14 = ssub.s32 128, 128
      %15 = vsyncadd [#allocation4], %s14
      %s17 = sshll.u32 [#allocation3], 4
      %s18 = int_to_ptr.vmem [resolvable:$true] %s17
      %20 = dma.hbm_to_vmem [thread:$0]  %s0, 128, %s18, [#allocation4]
    $region5: #{tpu_custom_call.1} parent=1 // pred_fallthru
      _
    // Predicated region
    $region6: #{tpu_custom_call.1} parent=1 // pred_check
      _
    $region7: #{tpu_custom_call.1} parent=1 // pred_check_branch
      %22 = sbr.rel (0) target = $region9
    $region8: #{tpu_custom_call.1} parent=1 // pred_region
      %s24 = ssub.s32 128, 128
      %25 = vsyncadd [#allocation7], %s24
      %s27 = sshll.u32 [#allocation6], 4
      %s28 = int_to_ptr.vmem [resolvable:$true] %s27
      %30 = dma.hbm_to_vmem [thread:$0]  %s1, 128, %s28, [#allocation7]
    $region9: #{tpu_custom_call.1} parent=1 // pred_fallthru
      _
    // Predicated region
    $region10: #{tpu_custom_call.1} parent=1 // pred_check
      _
    $region11: #{tpu_custom_call.1} parent=1 // pred_check_branch
      %32 = sbr.rel (0) target = $region13
    $region12: #{tpu_custom_call.1} parent=1 // pred_region
      %s34 = ssub.s32 128, 128
      %35 = vsyncadd [#allocation7], %s34
      %s37 = sshll.u32 [#allocation8], 4
      %s38 = int_to_ptr.vmem [resolvable:$true] %s37
      %40 = dma.hbm_to_vmem [thread:$0]  %s2, 128, %s38, [#allocation7]
    $region13: #{tpu_custom_call.1} parent=1 // pred_fallthru
      _
    // Predicated region
    $region14: #{tpu_custom_call.1} parent=1 // pred_check
      _
    $region15: #{tpu_custom_call.1} parent=1 // pred_check_branch
      %42 = sbr.rel (0) target = $region17
    $region16: #{tpu_custom_call.1} parent=1 // pred_region
      %43 = dma.done [#allocation4], 128
    $region17: #{tpu_custom_call.1} parent=1 // pred_fallthru
      _
    // Predicated region
    $region18: #{tpu_custom_call.1} parent=1 // pred_check
      _
    $region19: #{tpu_custom_call.1} parent=1 // pred_check_branch
      %45 = sbr.rel (0) target = $region21
    $region20: #{tpu_custom_call.1} parent=1 // pred_region
      %46 = dma.done [#allocation7], 128
    $region21: #{tpu_custom_call.1} parent=1 // pred_fallthru
      _
    // Predicated region
    $region22: #{tpu_custom_call.1} parent=1 // pred_check
      _
    $region23: #{tpu_custom_call.1} parent=1 // pred_check_branch
      %48 = sbr.rel (0) target = $region25
    $region24: #{tpu_custom_call.1} parent=1 // pred_region
      %49 = dma.done [#allocation7], 128
    $region25: #{tpu_custom_call.1} parent=1 // pred_fallthru
      _
    %p50 = scmp.eq.s32.totalorder 0, 0
    // Predicated region
    $region26: #{tpu_custom_call.1} parent=1 // pred_check
      %p51 = pneg %p50
    $region27: #{tpu_custom_call.1} parent=1 // pred_check_branch
      %53 = sbr.rel (%p51) target = $region29
    $region28: #{tpu_custom_call.1} parent=1 // pred_region
      %vm54 = vcmask 7168
      %55 = vst.msk [vmem:[#allocation2] sm:$0xff] %vm54, 0.0
    $region29: #{tpu_custom_call.1} parent=1 // pred_fallthru
      _
    %v56 = vld [vmem:[#allocation3] sm:$0xff]
    %v57 = vld [vmem:[#allocation6] sm:$0xff]
    %v58 = vld [vmem:[#allocation8] sm:$0xff]
    %v59 = vsub.f32 %v57, %v58
    %v60 = vadd.f32 %v57, %v58
    %v61 = vmul.f32 %v56, 2.0
    %v62 = vsub.f32 %v60, %v61
    %v63 = vmul.f32 %v59, %v62
    %64 = vadd.xlane.f32.xlu0 %v63
    %v65 = vpop.xlane.xlu0 %64
    %v66 = vadd.f32 %v65, 0.2
    %v67 = vmax.f32 %v66, 0.0
    %v68 = vld [vmem:[#allocation2] sm:$0xff]
    %v69 = vadd.f32 %v68, %v67
    %vm70 = vcmask 7168
    %71 = vst.msk [vmem:[#allocation2] sm:$0xff] %vm70, %v69
    // Predicated region
    $region30: #{tpu_custom_call.1} parent=1 // pred_check
      %p72 = pneg %p50
    $region31: #{tpu_custom_call.1} parent=1 // pred_check_branch
      %74 = sbr.rel (%p72) target = $region33
    $region32: #{tpu_custom_call.1} parent=1 // pred_region
      %v75 = vld [vmem:[#allocation2] sm:$0xff]
      %v76 = vsel %vm70, %v75, 0.0
      %v77 = vrot.slane %v76, 4
      %v78 = vadd.f32 %v76, %v77
      %v79 = vrot.slane %v78, 2
      %v80 = vadd.f32 %v78, %v79
      %v81 = vrot.slane %v80, 1
      %v82 = vadd.f32 %v80, %v81
      %v83 = vmul.f32 %v82, 0.125
      %85 = vset.pattern.permute.xlu0 0
      %86 = vperm.xlu0 %85, %v83
      %v87 = vpop.permute.xlu0 %86
      %89 = vst [vmem:[#allocation9] sm:$0xff] %v87
    $region33: #{tpu_custom_call.1} parent=1 // pred_fallthru
      _
    // Predicated region
    $region34: #{tpu_custom_call.1} parent=1 // pred_check
      _
    $region35: #{tpu_custom_call.1} parent=1 // pred_check_branch
      %91 = sbr.rel (0) target = $region37
    $region36: #{tpu_custom_call.1} parent=1 // pred_region
      %s93 = ssub.s32 128, 128
      %94 = vsyncadd [#allocation5], %s93
      %s96 = sshll.u32 [#allocation9], 4
      %s97 = int_to_ptr.vmem [resolvable:$true] %s96
      %99 = dma.vmem_to_hbm [thread:$0]  %s97, 128, %s3, [#allocation5]
    $region37: #{tpu_custom_call.1} parent=1 // pred_fallthru
      _
    // Predicated region
    $region38: #{tpu_custom_call.1} parent=1 // pred_check
      _
    $region39: #{tpu_custom_call.1} parent=1 // pred_check_branch
      %101 = sbr.rel (0) target = $region41
    $region40: #{tpu_custom_call.1} parent=1 // pred_region
      %102 = dma.done [#allocation5], 128
    $region41: #{tpu_custom_call.1} parent=1 // pred_fallthru
      _
    %103 = vsyncpa [#allocation4], 1
    %104 = vsyncpa [#allocation7], 1
    %105 = vsyncpa [#allocation5], 1

</llo_original>
